<compile_context>
chip_gen: v5e
topology: v5e:2x2
jax: 0.10.0
libtpu: 0.0.40
codegen_flags: <defaults>
</compile_context>

<pallas_src>
import functools

import numpy as np

import jax
import jax.numpy as jnp
from jax.experimental import pallas as pl
from jax.experimental.pallas import tpu as pltpu


def _reweight_ce_kernel(logits_ref, labels_ref, weights_ref, out_ref,
                        acc_l_ref, acc_w_ref, *, n_total):
    core = pl.program_id(0)          # megacore split of the sample axis
    i = pl.program_id(1)             # tile sweep (reduction axis)
    tiles_per_core = pl.num_programs(1)

    @pl.when(i == 0)
    def _init():
        acc_l_ref[...] = jnp.zeros_like(acc_l_ref)   # per-class partial losses
        acc_w_ref[...] = jnp.zeros_like(acc_w_ref)   # per-class partial weights

    x = logits_ref[...].astype(jnp.float32)          # (TN, C), native dtype DMA
    lbl = labels_ref[...]                            # (TN, 1) int32
    w = weights_ref[...].astype(jnp.float32)         # (1, C)

    tile_n = x.shape[0]

    # Row-wise log-sum-exp over the class (lane) axis.
    m = jnp.max(x, axis=-1, keepdims=True)                               # (TN,1)
    lse = jnp.log(jnp.sum(jnp.exp(x - m), axis=-1, keepdims=True)) + m   # (TN,1)

    # Valid-row mask: covers the ragged last tile and any clamped / OOB block
    # of the megacore split.  Computed from the *unclamped* global row index.
    row = jax.lax.broadcasted_iota(jnp.int32, (tile_n, 1), 0)            # (TN,1)
    g_row = (core * tiles_per_core + i) * tile_n + row
    valid = g_row < n_total                                              # (TN,1)

    # One-hot target selection fused with the valid mask.  Per-element target
    # contribution: w[c] * (-logpt) = w[c] * (lse - x[., c]) on the hit class.
    cls = jax.lax.broadcasted_iota(jnp.int32, x.shape, 1)                # (TN,C)
    hit = (cls == lbl) & valid                                           # (TN,C)

    # NaN-safe selects: garbage rows (lse may be Inf/NaN) contribute exact 0.
    loss_e = jnp.where(hit, w * (lse - x), 0.0)                          # (TN,C)
    w_e = jnp.where(hit, w, 0.0)                                         # (TN,C)

    # Sublane-axis reduce only; stays vector-shaped across grid steps.
    acc_l_ref[...] += jnp.sum(loss_e, axis=0, keepdims=True)             # (1, C)
    acc_w_ref[...] += jnp.sum(w_e, axis=0, keepdims=True)                # (1, C)

    @pl.when(i == tiles_per_core - 1)
    def _finalize():
        lsum = jnp.sum(acc_l_ref[...])
        wsum = jnp.sum(acc_w_ref[...])
        sub = jax.lax.broadcasted_iota(jnp.int32, (8, 128), 0)
        # Row 0 = weighted-loss sum, row 1 = weight sum (lane-dense tile).
        out_ref[...] = jnp.where(sub == 0, lsum,
                                 jnp.where(sub == 1, wsum, 0.0))


def weighted_cross_entropy(logits, labels, weights, *, tile_n=None):
    """F.cross_entropy(logits, labels, weight=weights), mean reduction."""
    n, c = logits.shape
    itemsize = jnp.dtype(logits.dtype).itemsize

    if tile_n is None:
        # ~4 MiB of logits per block; with double buffering (+labels) this is
        # ~9-10 MiB of VMEM -- fits every generation once vmem_limit_bytes is
        # raised explicitly (v5e default scoped VMEM is 16 MiB).
        cap = max(256, (4 * 1024 * 1024) // max(c * itemsize, 1))
        cap = (cap // 8) * 8
        tile_n = min(cap, ((n + 7) // 8) * 8)
    tile_n = max(8, (tile_n // 8) * 8)

    num_tiles = pl.cdiv(n, tile_n)
    # Leading "parallel" axis: v7x runs each half on its own TensorCore with
    # private scratch + its own output block; v5e/v6e just run it sequentially.
    splits = 2 if num_tiles >= 2 else 1
    tiles_per_core = pl.cdiv(num_tiles, splits)

    labels2d = labels.astype(jnp.int32).reshape(n, 1)
    weights2d = weights.astype(jnp.float32).reshape(1, c)

    def tile_map(s, i):
        # Clamp so an over-covering core never produces an out-of-range block
        # index; the duplicated block contributes 0 (masked by g_row >= n).
        return (jnp.minimum(s * tiles_per_core + i, num_tiles - 1), 0)

    kernel = functools.partial(_reweight_ce_kernel, n_total=n)

    cost = pl.CostEstimate(
        flops=8 * n * c,
        transcendentals=n * c,
        bytes_accessed=n * c * itemsize + n * 4 + c * 4 + splits * 8 * 128 * 4,
    )

    partials = pl.pallas_call(
        kernel,
        out_shape=jax.ShapeDtypeStruct((splits * 8, 128), jnp.float32),
        grid_spec=pltpu.PrefetchScalarGridSpec(
            num_scalar_prefetch=0,
            grid=(splits, tiles_per_core),
            in_specs=[
                pl.BlockSpec((tile_n, c), tile_map),           # logits (N, C)
                pl.BlockSpec((tile_n, 1), tile_map),           # labels (N, 1)
                pl.BlockSpec((1, c), lambda s, i: (0, 0)),     # class weights
            ],
            out_specs=pl.BlockSpec((8, 128), lambda s, i: (s, 0)),
            scratch_shapes=[pltpu.VMEM((1, c), jnp.float32),
                            pltpu.VMEM((1, c), jnp.float32)],
        ),
        compiler_params=pltpu.CompilerParams(
            dimension_semantics=("parallel", "arbitrary"),
            vmem_limit_bytes=32 * 1024 * 1024),
        cost_estimate=cost,
    )(logits, labels2d, weights2d)

    part = partials.reshape(splits, 8, 128)
    loss_sum = jnp.sum(part[:, 0, 0])
    weight_sum = jnp.sum(part[:, 1, 0])
    return loss_sum / weight_sum


class ReweightLoss:
    """JAX/Pallas port of the relation-head ReweightLoss module."""

    def __init__(self, num_class, samples_per_cls):
        self.num_class = num_class
        w = 1.0 / np.asarray(samples_per_cls, dtype=np.float64)
        w = w / np.sum(w) * num_class
        self.weights = jnp.asarray(w, dtype=jnp.float32)

    def __call__(self, logits, labels):
        return weighted_cross_entropy(logits, labels, self.weights)


def _reweight_loss_ref(logits, labels, weights):
    x = logits.astype(jnp.float32)
    log_sm = jax.nn.log_softmax(x, axis=-1)
    logpt = jnp.take_along_axis(
        log_sm, labels.astype(jnp.int32)[:, None], axis=-1)[:, 0]
    w = weights.astype(jnp.float32)[labels]
    return jnp.sum(-w * logpt) / jnp.sum(w)


if __name__ == "__main__":
    num_class = 16
    samples_per_cls = np.array(
        [12, 5, 33, 7, 21, 9, 14, 3, 27, 11, 6, 18, 4, 25, 8, 16],
        dtype=np.float64)

    key = jax.random.PRNGKey(0)
    k1, k2, k3, k4, k5, k6 = jax.random.split(key, 6)

    loss_mod = ReweightLoss(num_class, samples_per_cls)

    # Case 1: f32 logits, tiny batch, single tile, single core-split.
    n1 = 8
    logits1 = jax.random.normal(k1, (n1, num_class), dtype=jnp.float32)
    labels1 = jax.random.randint(k2, (n1,), 0, num_class, dtype=jnp.int32)
    out1 = jax.block_until_ready(loss_mod(logits1, labels1))
    ref1 = _reweight_loss_ref(logits1, labels1, loss_mod.weights)
    assert jnp.allclose(out1, ref1, atol=1e-5, rtol=1e-5), (out1, ref1)

    # Case 2: bf16 logits (native dtype through the DMA), ragged N (300 % 64
    # != 0), multi-tile, two-way core split with a clamped trailing block.
    n2 = 300
    logits2 = jax.random.normal(k3, (n2, num_class), dtype=jnp.bfloat16)
    labels2 = jax.random.randint(k4, (n2,), 0, num_class, dtype=jnp.int32)
    out2 = jax.block_until_ready(
        weighted_cross_entropy(logits2, labels2, loss_mod.weights, tile_n=64))
    ref2 = _reweight_loss_ref(logits2, labels2, loss_mod.weights)
    assert jnp.allclose(out2, ref2, atol=1e-4, rtol=1e-4), (out2, ref2)

    # Case 3: f32 logits, evenly divided multi-tile path.
    n3 = 4096
    logits3 = jax.random.normal(k5, (n3, num_class), dtype=jnp.float32)
    labels3 = jax.random.randint(k6, (n3,), 0, num_class, dtype=jnp.int32)
    out3 = jax.block_until_ready(
        weighted_cross_entropy(logits3, labels3, loss_mod.weights, tile_n=512))
    ref3 = _reweight_loss_ref(logits3, labels3, loss_mod.weights)
    assert jnp.allclose(out3, ref3, atol=1e-5, rtol=1e-5), (out3, ref3)

    print("KERNEL_OK")
</pallas_src>

<mosaic_0001>
module attributes {stable_mosaic.version = 11 : i64} {
  func.func @_reweight_ce_kernel(%arg0: i32, %arg1: i32, %arg2: memref<8x16xf32, #tpu.memory_space<vmem>>, %arg3: memref<8x1xi32, #tpu.memory_space<vmem>>, %arg4: memref<1x16xf32, #tpu.memory_space<vmem>>, %arg5: memref<8x128xf32, #tpu.memory_space<vmem>>, %arg6: memref<1x16xf32, #tpu.memory_space<vmem>>, %arg7: memref<1x16xf32, #tpu.memory_space<vmem>>) attributes {dimension_semantics = [#tpu.dimension_semantics<parallel>, #tpu.dimension_semantics<arbitrary>], iteration_bounds = array<i64: 1, 1>, scalar_prefetch = 0 : i64, scratch_operands = 2 : i64, tpu.core_type = #tpu.core_type<tc>, window_params = [{transform_indices = @transform_0, window_bounds = array<i64: 8, 16>}, {transform_indices = @transform_1, window_bounds = array<i64: 8, 1>}, {pipeline_mode = #tpu.pipeline_mode<synchronous>, transform_indices = @transform_2, window_bounds = array<i64: 1, 16>}, {transform_indices = @transform_3, window_bounds = array<i64: 8, 128>}]} {
    %c0_i32 = arith.constant 0 : i32
    %0 = arith.cmpi eq, %arg1, %c0_i32 : i32
    %1 = arith.extui %0 : i1 to i32
    %c0_i32_0 = arith.constant 0 : i32
    %2 = arith.cmpi ne, %1, %c0_i32_0 : i32
    scf.if %2 {
      %cst_22 = arith.constant 0.000000e+00 : f32
      %51 = vector.broadcast %cst_22 : f32 to vector<1x16xf32>
      %c0_23 = arith.constant 0 : index
      %c0_24 = arith.constant 0 : index
      %52 = vector.load %arg6[%c0_23, %c0_24] : memref<1x16xf32, #tpu.memory_space<vmem>>, vector<1x16xf32>
      tpu.vector_store %arg6[%c0_23, %c0_24], %51 {strides = array<i32>} : memref<1x16xf32, #tpu.memory_space<vmem>>, vector<1x16xf32>,
      %cst_25 = arith.constant 0.000000e+00 : f32
      %53 = vector.broadcast %cst_25 : f32 to vector<1x16xf32>
      %c0_26 = arith.constant 0 : index
      %c0_27 = arith.constant 0 : index
      %54 = vector.load %arg7[%c0_26, %c0_27] : memref<1x16xf32, #tpu.memory_space<vmem>>, vector<1x16xf32>
      tpu.vector_store %arg7[%c0_26, %c0_27], %53 {strides = array<i32>} : memref<1x16xf32, #tpu.memory_space<vmem>>, vector<1x16xf32>,
    } else {
    }
    %c0 = arith.constant 0 : index
    %c0_1 = arith.constant 0 : index
    %3 = vector.load %arg2[%c0, %c0_1] : memref<8x16xf32, #tpu.memory_space<vmem>>, vector<8x16xf32>
    %c0_2 = arith.constant 0 : index
    %c0_3 = arith.constant 0 : index
    %4 = vector.load %arg3[%c0_2, %c0_3] : memref<8x1xi32, #tpu.memory_space<vmem>>, vector<8x1xi32>
    %c0_4 = arith.constant 0 : index
    %c0_5 = arith.constant 0 : index
    %5 = vector.load %arg4[%c0_4, %c0_5] : memref<1x16xf32, #tpu.memory_space<vmem>>, vector<1x16xf32>
    %cst = arith.constant dense<0xFF800000> : vector<8xf32>
    %6 = vector.multi_reduction <maximumf>, %3, %cst [1] : vector<8x16xf32> to vector<8xf32>
    %7 = vector.shape_cast %6 : vector<8xf32> to vector<8x1xf32>
    %8 = vector.broadcast %7 : vector<8x1xf32> to vector<8x16xf32>
    %9 = arith.subf %3, %8 : vector<8x16xf32>
    %10 = math.exp %9 : vector<8x16xf32>
    %cst_6 = arith.constant dense<0.000000e+00> : vector<8xf32>
    %11 = vector.multi_reduction <add>, %10, %cst_6 [1] : vector<8x16xf32> to vector<8xf32>
    %12 = vector.shape_cast %11 : vector<8xf32> to vector<8x1xf32>
    %13 = math.log %12 : vector<8x1xf32>
    %14 = arith.addf %13, %7 : vector<8x1xf32>
    %15 = tpu.iota {dimensions = array<i32: 0>} : vector<8x1xi32>
    %c1_i32 = arith.constant 1 : i32
    %16 = arith.muli %arg0, %c1_i32 : i32
    %17 = arith.addi %16, %arg1 : i32
    %c8_i32 = arith.constant 8 : i32
    %18 = arith.muli %17, %c8_i32 : i32
    %19 = vector.broadcast %18 : i32 to vector<8x1xi32>
    %20 = arith.addi %19, %15 : vector<8x1xi32>
    %c8_i32_7 = arith.constant 8 : i32
    %21 = vector.broadcast %c8_i32_7 : i32 to vector<8x1xi32>
    %22 = arith.cmpi slt, %20, %21 : vector<8x1xi32>
    %23 = tpu.iota {dimensions = array<i32: 1>} : vector<8x16xi32>
    %24 = vector.broadcast %4 : vector<8x1xi32> to vector<8x16xi32>
    %25 = arith.cmpi eq, %23, %24 : vector<8x16xi32>
    %26 = vector.broadcast %22 : vector<8x1xi1> to vector<8x16xi1>
    %27 = arith.andi %25, %26 : vector<8x16xi1>
    %28 = vector.broadcast %14 : vector<8x1xf32> to vector<8x16xf32>
    %29 = arith.subf %28, %3 : vector<8x16xf32>
    %30 = vector.broadcast %5 : vector<1x16xf32> to vector<8x16xf32>
    %31 = arith.mulf %30, %29 : vector<8x16xf32>
    %cst_8 = arith.constant 0.000000e+00 : f32
    %32 = vector.broadcast %cst_8 : f32 to vector<8x16xf32>
    %33 = arith.select %27, %31, %32 : vector<8x16xi1>, vector<8x16xf32>
    %cst_9 = arith.constant 0.000000e+00 : f32
    %34 = vector.shape_cast %5 : vector<1x16xf32> to vector<1x16xf32>
    %35 = vector.broadcast %34 : vector<1x16xf32> to vector<8x16xf32>
    %36 = vector.broadcast %cst_9 : f32 to vector<8x16xf32>
    %37 = arith.select %27, %35, %36 : vector<8x16xi1>, vector<8x16xf32>
    %c0_10 = arith.constant 0 : index
    %c0_11 = arith.constant 0 : index
    %38 = vector.load %arg6[%c0_10, %c0_11] : memref<1x16xf32, #tpu.memory_space<vmem>>, vector<1x16xf32>
    %cst_12 = arith.constant dense<0.000000e+00> : vector<16xf32>
    %39 = vector.multi_reduction <add>, %33, %cst_12 [0] : vector<8x16xf32> to vector<16xf32>
    %40 = vector.shape_cast %39 : vector<16xf32> to vector<1x16xf32>
    %41 = arith.addf %38, %40 : vector<1x16xf32>
    %c0_13 = arith.constant 0 : index
    %c0_14 = arith.constant 0 : index
    %42 = vector.load %arg6[%c0_13, %c0_14] : memref<1x16xf32, #tpu.memory_space<vmem>>, vector<1x16xf32>
    tpu.vector_store %arg6[%c0_13, %c0_14], %41 {strides = array<i32>} : memref<1x16xf32, #tpu.memory_space<vmem>>, vector<1x16xf32>,
    %c0_15 = arith.constant 0 : index
    %c0_16 = arith.constant 0 : index
    %43 = vector.load %arg7[%c0_15, %c0_16] : memref<1x16xf32, #tpu.memory_space<vmem>>, vector<1x16xf32>
    %cst_17 = arith.constant dense<0.000000e+00> : vector<16xf32>
    %44 = vector.multi_reduction <add>, %37, %cst_17 [0] : vector<8x16xf32> to vector<16xf32>
    %45 = vector.shape_cast %44 : vector<16xf32> to vector<1x16xf32>
    %46 = arith.addf %43, %45 : vector<1x16xf32>
    %c0_18 = arith.constant 0 : index
    %c0_19 = arith.constant 0 : index
    %47 = vector.load %arg7[%c0_18, %c0_19] : memref<1x16xf32, #tpu.memory_space<vmem>>, vector<1x16xf32>
    tpu.vector_store %arg7[%c0_18, %c0_19], %46 {strides = array<i32>} : memref<1x16xf32, #tpu.memory_space<vmem>>, vector<1x16xf32>,
    %c0_i32_20 = arith.constant 0 : i32
    %48 = arith.cmpi eq, %arg1, %c0_i32_20 : i32
    %49 = arith.extui %48 : i1 to i32
    %c0_i32_21 = arith.constant 0 : i32
    %50 = arith.cmpi ne, %49, %c0_i32_21 : i32
    scf.if %50 {
      %c0_22 = arith.constant 0 : index
      %c0_23 = arith.constant 0 : index
      %51 = vector.load %arg6[%c0_22, %c0_23] : memref<1x16xf32, #tpu.memory_space<vmem>>, vector<1x16xf32>
      %52 = vector.shape_cast %51 : vector<1x16xf32> to vector<1x1x16xf32>
      %cst_24 = arith.constant dense<0.000000e+00> : vector<1xf32>
      %53 = vector.multi_reduction <add>, %52, %cst_24 [1, 2] : vector<1x1x16xf32> to vector<1xf32>
      %54 = vector.shape_cast %53 : vector<1xf32> to vector<1x1x1xf32>
      %55 = vector.extract %54[0, 0, 0] : f32 from vector<1x1x1xf32>
      %c0_25 = arith.constant 0 : index
      %c0_26 = arith.constant 0 : index
      %56 = vector.load %arg7[%c0_25, %c0_26] : memref<1x16xf32, #tpu.memory_space<vmem>>, vector<1x16xf32>
      %57 = vector.shape_cast %56 : vector<1x16xf32> to vector<1x1x16xf32>
      %cst_27 = arith.constant dense<0.000000e+00> : vector<1xf32>
      %58 = vector.multi_reduction <add>, %57, %cst_27 [1, 2] : vector<1x1x16xf32> to vector<1xf32>
      %59 = vector.shape_cast %58 : vector<1xf32> to vector<1x1x1xf32>
      %60 = vector.extract %59[0, 0, 0] : f32 from vector<1x1x1xf32>
      %61 = tpu.iota {dimensions = array<i32: 0>} : vector<8x128xi32>
      %c0_i32_28 = arith.constant 0 : i32
      %62 = vector.broadcast %c0_i32_28 : i32 to vector<8x128xi32>
      %63 = arith.cmpi eq, %61, %62 : vector<8x128xi32>
      %c1_i32_29 = arith.constant 1 : i32
      %64 = vector.broadcast %c1_i32_29 : i32 to vector<8x128xi32>
      %65 = arith.cmpi eq, %61, %64 : vector<8x128xi32>
      %cst_30 = arith.constant 0.000000e+00 : f32
      %66 = vector.broadcast %60 : f32 to vector<8x128xf32>
      %67 = vector.broadcast %cst_30 : f32 to vector<8x128xf32>
      %68 = arith.select %65, %66, %67 : vector<8x128xi1>, vector<8x128xf32>
      %69 = vector.broadcast %55 : f32 to vector<8x128xf32>
      %70 = arith.select %63, %69, %68 : vector<8x128xi1>, vector<8x128xf32>
      %c0_31 = arith.constant 0 : index
      %c0_32 = arith.constant 0 : index
      %71 = vector.load %arg5[%c0_31, %c0_32] : memref<8x128xf32, #tpu.memory_space<vmem>>, vector<8x128xf32>
      tpu.vector_store %arg5[%c0_31, %c0_32], %70 {strides = array<i32>} : memref<8x128xf32, #tpu.memory_space<vmem>>, vector<8x128xf32>,
    } else {
    }
    return
  }
  func.func @transform_0(%arg0: i32, %arg1: i32) -> (i32, i32) {
    %c1_i32 = arith.constant 1 : i32
    %0 = arith.muli %arg0, %c1_i32 : i32
    %1 = arith.addi %0, %arg1 : i32
    %c0_i32 = arith.constant 0 : i32
    %2 = arith.minsi %1, %c0_i32 : i32
    %c0_i32_0 = arith.constant 0 : i32
    %c0_i32_1 = arith.constant 0 : i32
    return %2, %c0_i32_0 : i32, i32
  }
  func.func @transform_1(%arg0: i32, %arg1: i32) -> (i32, i32) {
    %c1_i32 = arith.constant 1 : i32
    %0 = arith.muli %arg0, %c1_i32 : i32
    %1 = arith.addi %0, %arg1 : i32
    %c0_i32 = arith.constant 0 : i32
    %2 = arith.minsi %1, %c0_i32 : i32
    %c0_i32_0 = arith.constant 0 : i32
    %c0_i32_1 = arith.constant 0 : i32
    return %2, %c0_i32_0 : i32, i32
  }
  func.func @transform_2(%arg0: i32, %arg1: i32) -> (i32, i32) {
    %c0_i32 = arith.constant 0 : i32
    %c0_i32_0 = arith.constant 0 : i32
    %c0_i32_1 = arith.constant 0 : i32
    return %c0_i32, %c0_i32_0 : i32, i32
  }
  func.func @transform_3(%arg0: i32, %arg1: i32) -> (i32, i32) {
    %c0_i32 = arith.constant 0 : i32
    %c0_i32_0 = arith.constant 0 : i32
    return %arg0, %c0_i32 : i32, i32
  }
}

</mosaic_0001>

<llo_original>
// kernel: tpu_custom_call.1
$region0: #{tpu_custom_call.1}
  #allocation0 [shape = 'u32[]', space=smem, size = 0x4, offset = 0x4, fixed_abs, tag = 'smem constant byte address 0x4 - core index']
  #allocation1 [shape = 'u32[72,128]{1,0:T(1,128)}', space=vmem, size = 0x9000, scoped, tag = 'internal scratch']
  #allocation2 [shape = 'f32[1,16]{1,0:T(1,128)}', space=vmem, size = 0x200, scoped, tag = 'scratch operand']
  #allocation3 [shape = 'f32[1,16]{1,0:T(1,128)}', space=vmem, size = 0x200, scoped, tag = 'scratch operand']
  %s0 = inlined_call_operand.vmem [shape: f32[8,16], index: 0, kind: input, shape index: {}]
  %s1 = inlined_call_operand.vmem [shape: s32[8,1], index: 1, kind: input, shape index: {}]
  %s2 = inlined_call_operand.vmem [shape: f32[1,16], index: 2, kind: input, shape index: {}]
  %s3 = inlined_call_operand.hbm [shape: f32[8,128], index: 3, kind: output, shape index: {}]
  %s4 = sld [smem:[#allocation0]]
  $region30: #{tpu_custom_call.1} parent=0
    _
  %s6 = ssub.s32 1, %s4
  %s7 = scalar_select 0, %s6, %s4
  $region1: #{tpu_custom_call.1} parent=0
    #allocation4 [shape = 'u8[4096]{0}', space=vmem, size = 0x1000, scoped, tag = 'output window, operand 0, single buffered']
    #allocation5 [shape = 's32[1]{0}', space=sflag, size = 0x4, scoped, tag = 'scoped memory for tpu_custom_call.1']
    %8 = vsyncpa [#allocation5], 0
    // Predicated region
    $region2: #{tpu_custom_call.1} parent=1 // pred_check
      _
    $region3: #{tpu_custom_call.1} parent=1 // pred_check_branch
      %10 = sbr.rel (0) target = $region5
    $region4: #{tpu_custom_call.1} parent=1 // pred_region
      %s11 = sadd.s32 0, 0
      %p12 = scmp.lt.s32.totalorder %s11, 0
      %s13 = scalar_select %p12, %s11, 0
      %p14 = scmp.lt.s32.totalorder %s13, 0
      %s15 = scalar_select %p14, %s13, 0
      %s16 = smul.addr %s15, 8
      %s17 = scalar_lea.vmem %s0, %s16
      %s18 = sadd.s32 0, 0
      %p19 = scmp.lt.s32.totalorder %s18, 0
      %s20 = scalar_select %p19, %s18, 0
    $region5: #{tpu_custom_call.1} parent=1 // pred_fallthru
      _
    // Predicated region
    $region6: #{tpu_custom_call.1} parent=1 // pred_check
      _
    $region7: #{tpu_custom_call.1} parent=1 // pred_check_branch
      %22 = sbr.rel (0) target = $region9
    $region8: #{tpu_custom_call.1} parent=1 // pred_region
      %s23 = sadd.s32 0, 0
      %p24 = scmp.lt.s32.totalorder %s23, 0
      %s25 = scalar_select %p24, %s23, 0
      %p26 = scmp.lt.s32.totalorder %s25, 0
      %s27 = scalar_select %p26, %s25, 0
      %s28 = smul.addr %s27, 8
      %s29 = scalar_lea.vmem %s1, %s28
      %s30 = sadd.s32 0, 0
      %p31 = scmp.lt.s32.totalorder %s30, 0
      %s32 = scalar_select %p31, %s30, 0
    $region9: #{tpu_custom_call.1} parent=1 // pred_fallthru
      _
    // Predicated region
    $region10: #{tpu_custom_call.1} parent=1 // pred_check
      _
    $region11: #{tpu_custom_call.1} parent=1 // pred_check_branch
      %34 = sbr.rel (0) target = $region13
    $region12: #{tpu_custom_call.1} parent=1 // pred_region
      _
    $region13: #{tpu_custom_call.1} parent=1 // pred_fallthru
      _
    %s35 = sadd.s32 0, 0
    %p36 = scmp.lt.s32.totalorder %s35, 0
    %s37 = scalar_select %p36, %s35, 0
    %p38 = scmp.lt.s32.totalorder %s37, 0
    %s39 = scalar_select %p38, %s37, 0
    %s40 = smul.addr %s39, 8
    %s41 = scalar_lea.vmem %s0, %s40
    %s42 = sadd.s32 0, 0
    %p43 = scmp.lt.s32.totalorder %s42, 0
    %s44 = scalar_select %p43, %s42, 0
    %p45 = scmp.lt.s32.totalorder %s44, 0
    %s46 = scalar_select %p45, %s44, 0
    %s47 = smul.addr %s46, 8
    %s48 = scalar_lea.vmem %s1, %s47
    %s49 = sadd.s32 0, 0
    %p50 = scmp.lt.s32.totalorder %s49, 0
    %s51 = scalar_select %p50, %s49, 0
    %p52 = scmp.lt.s32.totalorder %s51, 0
    %s53 = scalar_select %p52, %s51, 0
    %s54 = smul.addr %s53, 8
    %s55 = scalar_lea.vmem %s0, %s54
    %s56 = sadd.s32 0, 0
    %p57 = scmp.lt.s32.totalorder %s56, 0
    %s58 = scalar_select %p57, %s56, 0
    %s59 = sadd.s32 0, 0
    %p60 = scmp.lt.s32.totalorder %s59, 0
    %s61 = scalar_select %p60, %s59, 0
    %p62 = scmp.lt.s32.totalorder %s61, 0
    %s63 = scalar_select %p62, %s61, 0
    %s64 = smul.addr %s63, 8
    %s65 = scalar_lea.vmem %s1, %s64
    %s66 = sadd.s32 0, 0
    %p67 = scmp.lt.s32.totalorder %s66, 0
    %s68 = scalar_select %p67, %s66, 0
    %p69 = scmp.eq.s32.totalorder 0, 0
    // Predicated region
    $region14: #{tpu_custom_call.1} parent=1 // pred_check
      %p70 = pneg %p69
    $region15: #{tpu_custom_call.1} parent=1 // pred_check_branch
      %72 = sbr.rel (%p70) target = $region17
    $region16: #{tpu_custom_call.1} parent=1 // pred_region
      %vm73 = vcmask 122880
      %74 = vst.msk [vmem:[#allocation2] sm:$0x1] %vm73, 0.0
      %75 = vst.msk [vmem:[#allocation3] sm:$0x1] %vm73, 0.0
    $region17: #{tpu_custom_call.1} parent=1 // pred_fallthru
      _
    %v76 = vld [vmem:[%s55] sm:$0xff]
    %v77 = vld [vmem:[%s65] sm:$0xff]
    %v78 = vld [vmem:[%s2] sm:$0x1]
    %vm79 = vcmask 130048
    %v80 = vsel %vm79, %v76, -inf
    %81 = vmax.xlane.f32.xlu0 %v80
    %v82 = vpop.xlane.xlu0 %81
    %v83 = vsub.f32 %v76, %v82
    %v84 = vmul.f32 %v83, 1.442695
    %v85 = vpow.pop %v84
    %v86 = vsel %vm79, %v85, 0.0
    %87 = vadd.xlane.f32.xlu0 %v86
    %v88 = vpop.xlane.xlu0 %87
    %v89 = vlog2.pop %v88
    %v90 = vmul.f32 %v89, 0.6931472
    %v91 = vadd.f32 %v90, %v82
    %v92 = vlaneseq
    %v93 = vshrl.u32 %v92, 7
    %s94 = sadd.s32 0, 0
    %s95 = smul.u32 %s94, 8
    %v96 = vstv %s95
    %v97 = vadd.s32 %v96, %v93
    %vm98 = vcmp.lt.s32.totalorder %v97, 8
    %v99 = vlaneseq
    %v100 = vand.u32 %v99, 127
    %101 = vset.pattern.permute.xlu0 0
    %102 = vperm.xlu0 %101, %v77
    %v103 = vpop.permute.xlu0 %102
    %vm104 = vcmp.eq.s32.totalorder %v100, %v103
    %v105 = vsel %vm98, 1, 0
    %vm106 = vcmp.eq.s32.totalorder %v105, 1
    %vm107 = vmand %vm104, %vm106
    %v108 = vsub.f32 %v91, %v76
    %v110 = vperm.slane %v78, 0
    %v112 = vmul.f32 %v110, %v108
    %v113 = vsel %vm107, %v112, 0.0
    %v114 = vsel %vm107, %v110, 0.0
    %v115 = vld [vmem:[#allocation2] sm:$0x1]
    %v116 = vsel %vm79, %v113, 0.0
    %v117 = vrot.slane %v116, 4
    %v118 = vadd.f32 %v116, %v117
    %v119 = vrot.slane %v118, 2
    %v120 = vadd.f32 %v118, %v119
    %v121 = vrot.slane %v120, 1
    %v122 = vadd.f32 %v120, %v121
    %v123 = vadd.f32 %v115, %v122
    %vm124 = vcmask 122880
    %125 = vst.msk [vmem:[#allocation2] sm:$0x1] %vm124, %v123
    %v126 = vld [vmem:[#allocation3] sm:$0x1]
    %v127 = vsel %vm79, %v114, 0.0
    %v128 = vrot.slane %v127, 4
    %v129 = vadd.f32 %v127, %v128
    %v130 = vrot.slane %v129, 2
    %v131 = vadd.f32 %v129, %v130
    %v132 = vrot.slane %v131, 1
    %v133 = vadd.f32 %v131, %v132
    %v134 = vadd.f32 %v126, %v133
    %135 = vst.msk [vmem:[#allocation3] sm:$0x1] %vm124, %v134
    // Predicated region
    $region18: #{tpu_custom_call.1} parent=1 // pred_check
      %p136 = pneg %p69
    $region19: #{tpu_custom_call.1} parent=1 // pred_check_branch
      %138 = sbr.rel (%p136) target = $region21
    $region20: #{tpu_custom_call.1} parent=1 // pred_region
      %v139 = vld [vmem:[#allocation2] sm:$0x1]
      %v140 = vsel %vm124, %v139, 0.0
      %141 = vadd.xlane.f32.xlu0 %v140
      %v142 = vpop.xlane.xlu0 %141
      %v143 = vrot.slane %v142, 4
      %v144 = vadd.f32 %v142, %v143
      %v145 = vrot.slane %v144, 2
      %v146 = vadd.f32 %v144, %v145
      %v147 = vrot.slane %v146, 1
      %v148 = vadd.f32 %v146, %v147
      %s149 = vtos %v148
      %v150 = vld [vmem:[#allocation3] sm:$0x1]
      %v151 = vsel %vm124, %v150, 0.0
      %152 = vadd.xlane.f32.xlu0 %v151
      %v153 = vpop.xlane.xlu0 %152
      %v154 = vrot.slane %v153, 4
      %v155 = vadd.f32 %v153, %v154
      %v156 = vrot.slane %v155, 2
      %v157 = vadd.f32 %v155, %v156
      %v158 = vrot.slane %v157, 1
      %v159 = vadd.f32 %v157, %v158
      %s160 = vtos %v159
      %vm161 = vcmp.eq.s32.totalorder %v93, 0
      %vm162 = vcmp.eq.s32.totalorder %v93, 1
      %v163 = vstv %s160
      %v164 = vsel %vm162, %v163, 0.0
      %v165 = vstv %s149
      %v166 = vsel %vm161, %v165, %v164
      %167 = vst [vmem:[#allocation4] sm:$0xff] %v166
    $region21: #{tpu_custom_call.1} parent=1 // pred_fallthru
      _
    // Predicated region
    $region22: #{tpu_custom_call.1} parent=1 // pred_check
      _
    $region23: #{tpu_custom_call.1} parent=1 // pred_check_branch
      %169 = sbr.rel (0) target = $region25
    $region24: #{tpu_custom_call.1} parent=1 // pred_region
      %171 = vsyncadd [#allocation5], 0
      %s173 = sshll.u32 [#allocation4], 4
      %s174 = int_to_ptr.vmem [resolvable:$true] %s173
      %s175 = sshll.u32 %s3, 4
      %s176 = int_to_ptr.hbm [resolvable:$true] %s175
      %178 = dma.vmem_to_hbm [thread:$0]  %s174, 128, %s176, [#allocation5]
    $region25: #{tpu_custom_call.1} parent=1 // pred_fallthru
      _
    // Predicated region
    $region26: #{tpu_custom_call.1} parent=1 // pred_check
      _
    $region27: #{tpu_custom_call.1} parent=1 // pred_check_branch
      %180 = sbr.rel (0) target = $region29
    $region28: #{tpu_custom_call.1} parent=1 // pred_region
      %182 = dma.done [#allocation5], 128
    $region29: #{tpu_custom_call.1} parent=1 // pred_fallthru
      _
    %183 = vsyncpa [#allocation5], 1

</llo_original>
